<compile_context>
chip_gen: v6e
topology: v6e:2x2x1
jax: 0.10.0
libtpu: 0.0.40
codegen_flags: <defaults>
</compile_context>

<pallas_src>
import jax
import jax.numpy as jnp
from jax import lax
from jax.experimental import pallas as pl
from jax.experimental.pallas import tpu as pltpu


def _softplus(x):
    # Numerically-stable softplus, matches F.softplus default (beta=1).
    return jnp.logaddexp(x, 0.0)


def _round_up(x, m):
    return ((x + m - 1) // m) * m


def _tile_and_pad(dim, target, align):
    """Pick a tile size (multiple of `align`, at most ~`target`) and the padded dim."""
    tile = max(align, min(_round_up(target, align), _round_up(dim, align)))
    padded = _round_up(dim, tile)
    return tile, padded


def _pad2(a, rows, cols):
    pr, pc = rows - a.shape[0], cols - a.shape[1]
    if pr or pc:
        a = jnp.pad(a, ((0, pr), (0, pc)))
    return a


def stochastic_linear_kernel(x_ref, wmu_ref, wsp_ref, epsw_ref,
                             bmu_ref, bsp_ref, epsb_ref, o_ref, acc_ref):
    k = pl.program_id(2)

    @pl.when(k == 0)
    def _init():
        acc_ref[...] = jnp.zeros_like(acc_ref)

    # Reparameterized weight tile (tn, tk). Keep softplus/scale/add in f32 for
    # precision; cast only at the MXU boundary.
    w = (wmu_ref[...].astype(jnp.float32)
         + _softplus(wsp_ref[...].astype(jnp.float32))
         * epsw_ref[...].astype(jnp.float32))
    w = w.astype(x_ref.dtype)

    # acc += x_tile @ W_tile^T without materializing the transpose: contract
    # x dim 1 against w dim 1 directly on the MXU, f32 accumulation.
    acc_ref[...] += lax.dot_general(
        x_ref[...], w,
        dimension_numbers=(((1,), (1,)), ((), ())),
        preferred_element_type=jnp.float32)

    @pl.when(k == pl.num_programs(2) - 1)
    def _finalize():
        b = (bmu_ref[...].astype(jnp.float32)
             + _softplus(bsp_ref[...].astype(jnp.float32))
             * epsb_ref[...].astype(jnp.float32))
        o_ref[...] = (acc_ref[...] + b).astype(o_ref.dtype)


def stochastic_linear(x, weight_mu, weight_spsigma, bias_mu, bias_spsigma, key,
                      *, tm_target=256, tn_target=256, tk_target=512):
    """Pallas implementation of StochasticLinear.forward (bias=True)."""
    N, in_f = x.shape
    out_f = weight_mu.shape[0]

    # Reparameterization noise (same role as torch.normal in the module).
    kw, kb = jax.random.split(key)
    eps_w = jax.random.normal(kw, (out_f, in_f), dtype=jnp.float32)
    eps_b = jax.random.normal(kb, (out_f,), dtype=jnp.float32)

    # Tile sizes: rows sublane-aligned (8), cols/K lane-aligned (128).
    tm, N_p = _tile_and_pad(N, tm_target, 8)
    tn, out_p = _tile_and_pad(out_f, tn_target, 128)
    tk, in_p = _tile_and_pad(in_f, tk_target, 128)

    # Zero-pad to tile multiples. Padded K columns of x are zero, so padded
    # regions of the weight-shaped tensors contribute exactly 0; padded output
    # rows/cols are sliced off below.
    x_p = _pad2(x, N_p, in_p)
    wmu_p = _pad2(weight_mu, out_p, in_p)
    wsp_p = _pad2(weight_spsigma, out_p, in_p)
    epsw_p = _pad2(eps_w, out_p, in_p)
    bmu_p = _pad2(bias_mu.reshape(1, out_f), 1, out_p)
    bsp_p = _pad2(bias_spsigma.reshape(1, out_f), 1, out_p)
    epsb_p = _pad2(eps_b.reshape(1, out_f), 1, out_p)

    grid = (N_p // tm, out_p // tn, in_p // tk)

    cost = pl.CostEstimate(
        flops=2 * N * in_f * out_f,
        transcendentals=out_f * in_f + out_f,
        bytes_accessed=(3 * out_f * in_f + N * in_f + N * out_f + 3 * out_f) * 4,
    )

    y_p = pl.pallas_call(
        stochastic_linear_kernel,
        out_shape=jax.ShapeDtypeStruct((N_p, out_p), x.dtype),
        grid_spec=pltpu.PrefetchScalarGridSpec(
            num_scalar_prefetch=0,
            grid=grid,
            in_specs=[
                pl.BlockSpec((tm, tk), lambda i, j, k: (i, k)),   # x
                pl.BlockSpec((tn, tk), lambda i, j, k: (j, k)),   # weight_mu
                pl.BlockSpec((tn, tk), lambda i, j, k: (j, k)),   # weight_spsigma
                pl.BlockSpec((tn, tk), lambda i, j, k: (j, k)),   # eps_W
                pl.BlockSpec((1, tn), lambda i, j, k: (0, j)),    # bias_mu
                pl.BlockSpec((1, tn), lambda i, j, k: (0, j)),    # bias_spsigma
                pl.BlockSpec((1, tn), lambda i, j, k: (0, j)),    # eps_b
            ],
            out_specs=pl.BlockSpec((tm, tn), lambda i, j, k: (i, j)),
            scratch_shapes=[pltpu.VMEM((tm, tn), jnp.float32)],
        ),
        compiler_params=pltpu.CompilerParams(
            dimension_semantics=("parallel", "parallel", "arbitrary"),
            vmem_limit_bytes=32 * 1024 * 1024,
        ),
        cost_estimate=cost,
    )(x_p, wmu_p, wsp_p, epsw_p, bmu_p, bsp_p, epsb_p)

    return y_p[:N, :out_f]


if __name__ == "__main__":
    key = jax.random.PRNGKey(0)
    k_x, k_noise, k_x2, k_noise2, k_p2 = jax.random.split(key, 5)

    # ---- Test 1: small shapes consistent with the module (batch=8, 32 -> 32) ----
    N, in_features, out_features = 8, 32, 32
    x = jax.random.normal(k_x, (N, in_features), dtype=jnp.float32)

    # Deterministic parameter init, mirroring reset_parameters().
    weight_mu = jnp.zeros((out_features, in_features), dtype=jnp.float32)
    weight_spsigma = jnp.full((out_features, in_features), -1.0, dtype=jnp.float32)
    bias_mu = jnp.zeros((out_features,), dtype=jnp.float32)
    bias_spsigma = jnp.full((out_features,), -1.0, dtype=jnp.float32)

    y = stochastic_linear(x, weight_mu, weight_spsigma, bias_mu, bias_spsigma, k_noise)
    y = jax.block_until_ready(y)

    # Pure-JAX reference with the SAME epsilon draws.
    kw, kb = jax.random.split(k_noise)
    eps_w = jax.random.normal(kw, (out_features, in_features), dtype=jnp.float32)
    eps_b = jax.random.normal(kb, (out_features,), dtype=jnp.float32)
    w_ref = weight_mu + jax.nn.softplus(weight_spsigma) * eps_w
    b_ref = bias_mu + jax.nn.softplus(bias_spsigma) * eps_b
    y_ref = x @ w_ref.T + b_ref
    assert y.shape == (N, out_features)
    assert jnp.allclose(y, y_ref, atol=1e-5, rtol=1e-5)

    # ---- Test 2: exercise the multi-tile grid (padding + K accumulation) ----
    N2, in2, out2 = 16, 384, 256
    x2 = jax.random.normal(k_x2, (N2, in2), dtype=jnp.float32)
    wmu2 = 0.02 * jax.random.normal(k_p2, (out2, in2), dtype=jnp.float32)
    wsp2 = jnp.full((out2, in2), -1.0, dtype=jnp.float32)
    bmu2 = jnp.zeros((out2,), dtype=jnp.float32)
    bsp2 = jnp.full((out2,), -1.0, dtype=jnp.float32)

    y2 = stochastic_linear(x2, wmu2, wsp2, bmu2, bsp2, k_noise2,
                           tm_target=8, tn_target=128, tk_target=128)  # grid (2, 2, 3)
    y2 = jax.block_until_ready(y2)

    kw2, kb2 = jax.random.split(k_noise2)
    eps_w2 = jax.random.normal(kw2, (out2, in2), dtype=jnp.float32)
    eps_b2 = jax.random.normal(kb2, (out2,), dtype=jnp.float32)
    w_ref2 = wmu2 + jax.nn.softplus(wsp2) * eps_w2
    b_ref2 = bmu2 + jax.nn.softplus(bsp2) * eps_b2
    y_ref2 = x2 @ w_ref2.T + b_ref2
    assert y2.shape == (N2, out2)
    assert jnp.allclose(y2, y_ref2, atol=1e-4, rtol=1e-4)

    print("KERNEL_OK")
</pallas_src>

<mosaic_0001>
module attributes {stable_mosaic.version = 11 : i64} {
  func.func @stochastic_linear_kernel(%arg0: i32, %arg1: i32, %arg2: i32, %arg3: memref<8x128xf32, #tpu.memory_space<vmem>>, %arg4: memref<128x128xf32, #tpu.memory_space<vmem>>, %arg5: memref<128x128xf32, #tpu.memory_space<vmem>>, %arg6: memref<128x128xf32, #tpu.memory_space<vmem>>, %arg7: memref<1x128xf32, #tpu.memory_space<vmem>>, %arg8: memref<1x128xf32, #tpu.memory_space<vmem>>, %arg9: memref<1x128xf32, #tpu.memory_space<vmem>>, %arg10: memref<8x128xf32, #tpu.memory_space<vmem>>, %arg11: memref<8x128xf32, #tpu.memory_space<vmem>>) attributes {dimension_semantics = [#tpu.dimension_semantics<parallel>, #tpu.dimension_semantics<parallel>, #tpu.dimension_semantics<arbitrary>], iteration_bounds = array<i64: 1, 1, 1>, scalar_prefetch = 0 : i64, scratch_operands = 1 : i64, tpu.core_type = #tpu.core_type<tc>, window_params = [{transform_indices = @transform_0, window_bounds = array<i64: 8, 128>}, {transform_indices = @transform_1, window_bounds = array<i64: 128, 128>}, {transform_indices = @transform_2, window_bounds = array<i64: 128, 128>}, {transform_indices = @transform_3, window_bounds = array<i64: 128, 128>}, {transform_indices = @transform_4, window_bounds = array<i64: 1, 128>}, {transform_indices = @transform_5, window_bounds = array<i64: 1, 128>}, {transform_indices = @transform_6, window_bounds = array<i64: 1, 128>}, {transform_indices = @transform_7, window_bounds = array<i64: 8, 128>}]} {
    %c0_i32 = arith.constant 0 : i32
    %0 = arith.cmpi eq, %arg2, %c0_i32 : i32
    %1 = arith.extui %0 : i1 to i32
    %c0_i32_0 = arith.constant 0 : i32
    %2 = arith.cmpi ne, %1, %c0_i32_0 : i32
    scf.if %2 {
      %cst_16 = arith.constant 0.000000e+00 : f32
      %30 = vector.broadcast %cst_16 : f32 to vector<8x128xf32>
      %c0_17 = arith.constant 0 : index
      %c0_18 = arith.constant 0 : index
      %31 = vector.load %arg11[%c0_17, %c0_18] : memref<8x128xf32, #tpu.memory_space<vmem>>, vector<8x128xf32>
      tpu.vector_store %arg11[%c0_17, %c0_18], %30 {strides = array<i32>} : memref<8x128xf32, #tpu.memory_space<vmem>>, vector<8x128xf32>,
    } else {
    }
    %c0 = arith.constant 0 : index
    %c0_1 = arith.constant 0 : index
    %3 = vector.load %arg4[%c0, %c0_1] : memref<128x128xf32, #tpu.memory_space<vmem>>, vector<128x128xf32>
    %c0_2 = arith.constant 0 : index
    %c0_3 = arith.constant 0 : index
    %4 = vector.load %arg5[%c0_2, %c0_3] : memref<128x128xf32, #tpu.memory_space<vmem>>, vector<128x128xf32>
    %cst = arith.constant 0.000000e+00 : f32
    %5 = vector.broadcast %cst : f32 to vector<128x128xf32>
    %6 = arith.maximumf %4, %5 : vector<128x128xf32>
    %7 = vector.broadcast %cst : f32 to vector<128x128xf32>
    %8 = arith.subf %4, %7 : vector<128x128xf32>
    %9 = arith.cmpf one, %8, %8 : vector<128x128xf32>
    %10 = vector.broadcast %cst : f32 to vector<128x128xf32>
    %11 = arith.addf %4, %10 : vector<128x128xf32>
    %12 = math.absf %8 : vector<128x128xf32>
    %cst_4 = arith.constant 0.000000e+00 : f32
    %13 = vector.broadcast %cst_4 : f32 to vector<128x128xf32>
    %14 = arith.subf %13, %12 : vector<128x128xf32>
    %15 = math.exp %14 : vector<128x128xf32>
    %16 = math.log1p %15 : vector<128x128xf32>
    %17 = arith.addf %6, %16 : vector<128x128xf32>
    %18 = arith.select %9, %11, %17 : vector<128x128xi1>, vector<128x128xf32>
    %c0_5 = arith.constant 0 : index
    %c0_6 = arith.constant 0 : index
    %19 = vector.load %arg6[%c0_5, %c0_6] : memref<128x128xf32, #tpu.memory_space<vmem>>, vector<128x128xf32>
    %20 = arith.mulf %18, %19 : vector<128x128xf32>
    %21 = arith.addf %3, %20 : vector<128x128xf32>
    %c0_7 = arith.constant 0 : index
    %c0_8 = arith.constant 0 : index
    %22 = vector.load %arg11[%c0_7, %c0_8] : memref<8x128xf32, #tpu.memory_space<vmem>>, vector<8x128xf32>
    %c0_9 = arith.constant 0 : index
    %c0_10 = arith.constant 0 : index
    %23 = vector.load %arg3[%c0_9, %c0_10] : memref<8x128xf32, #tpu.memory_space<vmem>>, vector<8x128xf32>
    %cst_11 = arith.constant dense<0.000000e+00> : vector<8x128xf32>
    %24 = tpu.matmul %23, %21, %cst_11 {dimension_numbers = #tpu.dot_dimension_numbers<[1], [1], [0], [0], [0, 0, 1, 0], [], []>} : vector<8x128xf32>, vector<128x128xf32>, vector<8x128xf32> -> vector<8x128xf32>
    %25 = arith.addf %22, %24 : vector<8x128xf32>
    %c0_12 = arith.constant 0 : index
    %c0_13 = arith.constant 0 : index
    %26 = vector.load %arg11[%c0_12, %c0_13] : memref<8x128xf32, #tpu.memory_space<vmem>>, vector<8x128xf32>
    tpu.vector_store %arg11[%c0_12, %c0_13], %25 {strides = array<i32>} : memref<8x128xf32, #tpu.memory_space<vmem>>, vector<8x128xf32>,
    %c0_i32_14 = arith.constant 0 : i32
    %27 = arith.cmpi eq, %arg2, %c0_i32_14 : i32
    %28 = arith.extui %27 : i1 to i32
    %c0_i32_15 = arith.constant 0 : i32
    %29 = arith.cmpi ne, %28, %c0_i32_15 : i32
    scf.if %29 {
      %c0_16 = arith.constant 0 : index
      %c0_17 = arith.constant 0 : index
      %30 = vector.load %arg7[%c0_16, %c0_17] : memref<1x128xf32, #tpu.memory_space<vmem>>, vector<1x128xf32>
      %c0_18 = arith.constant 0 : index
      %c0_19 = arith.constant 0 : index
      %31 = vector.load %arg8[%c0_18, %c0_19] : memref<1x128xf32, #tpu.memory_space<vmem>>, vector<1x128xf32>
      %cst_20 = arith.constant 0.000000e+00 : f32
      %32 = vector.broadcast %cst_20 : f32 to vector<1x128xf32>
      %33 = arith.maximumf %31, %32 : vector<1x128xf32>
      %34 = vector.broadcast %cst_20 : f32 to vector<1x128xf32>
      %35 = arith.subf %31, %34 : vector<1x128xf32>
      %36 = arith.cmpf one, %35, %35 : vector<1x128xf32>
      %37 = vector.broadcast %cst_20 : f32 to vector<1x128xf32>
      %38 = arith.addf %31, %37 : vector<1x128xf32>
      %39 = math.absf %35 : vector<1x128xf32>
      %cst_21 = arith.constant 0.000000e+00 : f32
      %40 = vector.broadcast %cst_21 : f32 to vector<1x128xf32>
      %41 = arith.subf %40, %39 : vector<1x128xf32>
      %42 = math.exp %41 : vector<1x128xf32>
      %43 = math.log1p %42 : vector<1x128xf32>
      %44 = arith.addf %33, %43 : vector<1x128xf32>
      %45 = arith.select %36, %38, %44 : vector<1x128xi1>, vector<1x128xf32>
      %c0_22 = arith.constant 0 : index
      %c0_23 = arith.constant 0 : index
      %46 = vector.load %arg9[%c0_22, %c0_23] : memref<1x128xf32, #tpu.memory_space<vmem>>, vector<1x128xf32>
      %47 = arith.mulf %45, %46 : vector<1x128xf32>
      %48 = arith.addf %30, %47 : vector<1x128xf32>
      %c0_24 = arith.constant 0 : index
      %c0_25 = arith.constant 0 : index
      %49 = vector.load %arg11[%c0_24, %c0_25] : memref<8x128xf32, #tpu.memory_space<vmem>>, vector<8x128xf32>
      %50 = vector.broadcast %48 : vector<1x128xf32> to vector<8x128xf32>
      %51 = arith.addf %49, %50 : vector<8x128xf32>
      %c0_26 = arith.constant 0 : index
      %c0_27 = arith.constant 0 : index
      %52 = vector.load %arg10[%c0_26, %c0_27] : memref<8x128xf32, #tpu.memory_space<vmem>>, vector<8x128xf32>
      tpu.vector_store %arg10[%c0_26, %c0_27], %51 {strides = array<i32>} : memref<8x128xf32, #tpu.memory_space<vmem>>, vector<8x128xf32>,
    } else {
    }
    return
  }
  func.func @transform_0(%arg0: i32, %arg1: i32, %arg2: i32) -> (i32, i32) {
    %c0_i32 = arith.constant 0 : i32
    return %arg0, %arg2 : i32, i32
  }
  func.func @transform_1(%arg0: i32, %arg1: i32, %arg2: i32) -> (i32, i32) {
    %c0_i32 = arith.constant 0 : i32
    return %arg1, %arg2 : i32, i32
  }
  func.func @transform_2(%arg0: i32, %arg1: i32, %arg2: i32) -> (i32, i32) {
    %c0_i32 = arith.constant 0 : i32
    return %arg1, %arg2 : i32, i32
  }
  func.func @transform_3(%arg0: i32, %arg1: i32, %arg2: i32) -> (i32, i32) {
    %c0_i32 = arith.constant 0 : i32
    return %arg1, %arg2 : i32, i32
  }
  func.func @transform_4(%arg0: i32, %arg1: i32, %arg2: i32) -> (i32, i32) {
    %c0_i32 = arith.constant 0 : i32
    %c0_i32_0 = arith.constant 0 : i32
    return %c0_i32, %arg1 : i32, i32
  }
  func.func @transform_5(%arg0: i32, %arg1: i32, %arg2: i32) -> (i32, i32) {
    %c0_i32 = arith.constant 0 : i32
    %c0_i32_0 = arith.constant 0 : i32
    return %c0_i32, %arg1 : i32, i32
  }
  func.func @transform_6(%arg0: i32, %arg1: i32, %arg2: i32) -> (i32, i32) {
    %c0_i32 = arith.constant 0 : i32
    %c0_i32_0 = arith.constant 0 : i32
    return %c0_i32, %arg1 : i32, i32
  }
  func.func @transform_7(%arg0: i32, %arg1: i32, %arg2: i32) -> (i32, i32) {
    %c0_i32 = arith.constant 0 : i32
    return %arg0, %arg1 : i32, i32
  }
}

</mosaic_0001>

<llo_original>
// kernel: tpu_custom_call.1
$region0: #{tpu_custom_call.1}
  #allocation0 [shape = 'u32[]', space=smem, size = 0x4, offset = 0x4, fixed_abs, tag = 'smem constant byte address 0x4 - core index']
  #allocation1 [shape = 'u32[144,128]{1,0:T(1,128)}', space=vmem, size = 0x12000, scoped, tag = 'internal scratch']
  #allocation2 [shape = 'f32[8,128]{1,0:T(8,128)}', space=vmem, size = 0x1000, scoped, tag = 'scratch operand']
  %s0 = inlined_call_operand.hbm [shape: f32[8,128], index: 0, kind: input, shape index: {}]
  %s1 = inlined_call_operand.hbm [shape: f32[128,128], index: 1, kind: input, shape index: {}]
  %s2 = inlined_call_operand.hbm [shape: f32[128,128], index: 2, kind: input, shape index: {}]
  %s3 = inlined_call_operand.hbm [shape: f32[128,128], index: 3, kind: input, shape index: {}]
  %s4 = inlined_call_operand.vmem [shape: f32[1,128], index: 4, kind: input, shape index: {}]
  %s5 = inlined_call_operand.vmem [shape: f32[1,128], index: 5, kind: input, shape index: {}]
  %s6 = inlined_call_operand.vmem [shape: f32[1,128], index: 6, kind: input, shape index: {}]
  %s7 = inlined_call_operand.hbm [shape: f32[8,128], index: 7, kind: output, shape index: {}]
  %s8 = sld [smem:[#allocation0]]
  $region62: #{tpu_custom_call.1} parent=0
    _
  %s10 = ssub.s32 1, %s8
  %s11 = scalar_select 0, %s10, %s8
  $region1: #{tpu_custom_call.1} parent=0
    #allocation3 [shape = 'u8[4096]{0}', space=vmem, size = 0x1000, scoped, tag = 'input window, operand 0, single buffered']
    #allocation4 [shape = 's32[1]{0}', space=sflag, size = 0x4, scoped, tag = 'scoped memory for tpu_custom_call.1']
    #allocation5 [shape = 's32[1]{0}', space=sflag, size = 0x4, scoped, tag = 'scoped memory for tpu_custom_call.1']
    #allocation6 [shape = 'u8[65536]{0}', space=vmem, size = 0x10000, scoped, tag = 'input window, operand 1, single buffered']
    #allocation7 [shape = 's32[1]{0}', space=sflag, size = 0x4, scoped, tag = 'scoped memory for tpu_custom_call.1']
    #allocation8 [shape = 'u8[65536]{0}', space=vmem, size = 0x10000, scoped, tag = 'input window, operand 2, single buffered']
    #allocation9 [shape = 'u8[65536]{0}', space=vmem, size = 0x10000, scoped, tag = 'input window, operand 3, single buffered']
    #allocation10 [shape = 's32[1]{0}', space=sflag, size = 0x4, scoped, tag = 'scoped memory for tpu_custom_call.1']
    #allocation11 [shape = 'u8[4096]{0}', space=vmem, size = 0x1000, scoped, tag = 'output window, operand 0, single buffered']
    %12 = vsyncpa [#allocation4], 0
    %13 = vsyncpa [#allocation7], 0
    %14 = vsyncpa [#allocation10], 0
    %15 = vsyncpa [#allocation5], 0
    // Predicated region
    $region2: #{tpu_custom_call.1} parent=1 // pred_check
      _
    $region3: #{tpu_custom_call.1} parent=1 // pred_check_branch
      %17 = sbr.rel (0) target = $region5
    $region4: #{tpu_custom_call.1} parent=1 // pred_region
      %s19 = ssub.s32 128, 128
      %20 = vsyncadd [#allocation4], %s19
      %s22 = sshll.u32 [#allocation3], 4
      %s23 = int_to_ptr.vmem [resolvable:$true] %s22
      %25 = dma.hbm_to_vmem [thread:$0]  %s0, 128, %s23, [#allocation4]
    $region5: #{tpu_custom_call.1} parent=1 // pred_fallthru
      _
    // Predicated region
    $region6: #{tpu_custom_call.1} parent=1 // pred_check
      _
    $region7: #{tpu_custom_call.1} parent=1 // pred_check_branch
      %27 = sbr.rel (0) target = $region9
    $region8: #{tpu_custom_call.1} parent=1 // pred_region
      %s29 = ssub.s32 2048, 2048
      %30 = vsyncadd [#allocation7], %s29
      %s31 = sshll.u32 [#allocation6], 4
      %s32 = int_to_ptr.vmem [resolvable:$true] %s31
      %37 = dma.hbm_to_vmem [thread:$0]  %s1, 2048, %s32, [#allocation7], 128, 128, 8
    $region9: #{tpu_custom_call.1} parent=1 // pred_fallthru
      _
    // Predicated region
    $region10: #{tpu_custom_call.1} parent=1 // pred_check
      _
    $region11: #{tpu_custom_call.1} parent=1 // pred_check_branch
      %39 = sbr.rel (0) target = $region13
    $region12: #{tpu_custom_call.1} parent=1 // pred_region
      %s41 = ssub.s32 2048, 2048
      %42 = vsyncadd [#allocation7], %s41
      %s43 = sshll.u32 [#allocation8], 4
      %s44 = int_to_ptr.vmem [resolvable:$true] %s43
      %49 = dma.hbm_to_vmem [thread:$0]  %s2, 2048, %s44, [#allocation7], 128, 128, 8
    $region13: #{tpu_custom_call.1} parent=1 // pred_fallthru
      _
    // Predicated region
    $region14: #{tpu_custom_call.1} parent=1 // pred_check
      _
    $region15: #{tpu_custom_call.1} parent=1 // pred_check_branch
      %51 = sbr.rel (0) target = $region17
    $region16: #{tpu_custom_call.1} parent=1 // pred_region
      %s53 = ssub.s32 2048, 2048
      %54 = vsyncadd [#allocation10], %s53
      %s55 = sshll.u32 [#allocation9], 4
      %s56 = int_to_ptr.vmem [resolvable:$true] %s55
      %61 = dma.hbm_to_vmem [thread:$0]  %s3, 2048, %s56, [#allocation10], 128, 128, 8
    $region17: #{tpu_custom_call.1} parent=1 // pred_fallthru
      _
    // Predicated region
    $region18: #{tpu_custom_call.1} parent=1 // pred_check
      _
    $region19: #{tpu_custom_call.1} parent=1 // pred_check_branch
      %63 = sbr.rel (0) target = $region21
    $region20: #{tpu_custom_call.1} parent=1 // pred_region
      _
    $region21: #{tpu_custom_call.1} parent=1 // pred_fallthru
      _
    // Predicated region
    $region22: #{tpu_custom_call.1} parent=1 // pred_check
      _
    $region23: #{tpu_custom_call.1} parent=1 // pred_check_branch
      %65 = sbr.rel (0) target = $region25
    $region24: #{tpu_custom_call.1} parent=1 // pred_region
      _
    $region25: #{tpu_custom_call.1} parent=1 // pred_fallthru
      _
    // Predicated region
    $region26: #{tpu_custom_call.1} parent=1 // pred_check
      _
    $region27: #{tpu_custom_call.1} parent=1 // pred_check_branch
      %67 = sbr.rel (0) target = $region29
    $region28: #{tpu_custom_call.1} parent=1 // pred_region
      _
    $region29: #{tpu_custom_call.1} parent=1 // pred_fallthru
      _
    // Predicated region
    $region30: #{tpu_custom_call.1} parent=1 // pred_check
      _
    $region31: #{tpu_custom_call.1} parent=1 // pred_check_branch
      %69 = sbr.rel (0) target = $region33
    $region32: #{tpu_custom_call.1} parent=1 // pred_region
      %70 = dma.done [#allocation4], 128
    $region33: #{tpu_custom_call.1} parent=1 // pred_fallthru
      _
    // Predicated region
    $region34: #{tpu_custom_call.1} parent=1 // pred_check
      _
    $region35: #{tpu_custom_call.1} parent=1 // pred_check_branch
      %72 = sbr.rel (0) target = $region37
    $region36: #{tpu_custom_call.1} parent=1 // pred_region
      %73 = dma.done [#allocation7], 2048
    $region37: #{tpu_custom_call.1} parent=1 // pred_fallthru
      _
    // Predicated region
    $region38: #{tpu_custom_call.1} parent=1 // pred_check
      _
    $region39: #{tpu_custom_call.1} parent=1 // pred_check_branch
      %75 = sbr.rel (0) target = $region41
    $region40: #{tpu_custom_call.1} parent=1 // pred_region
      %76 = dma.done [#allocation7], 2048
    $region41: #{tpu_custom_call.1} parent=1 // pred_fallthru
      _
    // Predicated region
    $region42: #{tpu_custom_call.1} parent=1 // pred_check
      _
    $region43: #{tpu_custom_call.1} parent=1 // pred_check_branch
      %78 = sbr.rel (0) target = $region45
    $region44: #{tpu_custom_call.1} parent=1 // pred_region
      %79 = dma.done [#allocation10], 2048
    $region45: #{tpu_custom_call.1} parent=1 // pred_fallthru
      _
    %p80 = scmp.eq.s32.totalorder 0, 0
    // Predicated region
    $region46: #{tpu_custom_call.1} parent=1 // pred_check
      %p81 = pneg %p80
    $region47: #{tpu_custom_call.1} parent=1 // pred_check_branch
      %83 = sbr.rel (%p81) target = $region49
    $region48: #{tpu_custom_call.1} parent=1 // pred_region
      %84 = vst [vmem:[#allocation2] sm:$0xff] 0.0
    $region49: #{tpu_custom_call.1} parent=1 // pred_fallthru
      _
    %v85 = vld [vmem:[#allocation6] sm:$0xff]
    %v86 = vld [vmem:[#allocation6 + $0x8] sm:$0xff]
    %v87 = vld [vmem:[#allocation6 + $0x10] sm:$0xff]
    %v88 = vld [vmem:[#allocation6 + $0x18] sm:$0xff]
    %v89 = vld [vmem:[#allocation6 + $0x20] sm:$0xff]
    %v90 = vld [vmem:[#allocation6 + $0x28] sm:$0xff]
    %v91 = vld [vmem:[#allocation6 + $0x30] sm:$0xff]
    %v92 = vld [vmem:[#allocation6 + $0x38] sm:$0xff]
    %v93 = vld [vmem:[#allocation6 + $0x40] sm:$0xff]
    %v94 = vld [vmem:[#allocation6 + $0x48] sm:$0xff]
    %v95 = vld [vmem:[#allocation6 + $0x50] sm:$0xff]
    %v96 = vld [vmem:[#allocation6 + $0x58] sm:$0xff]
    %v97 = vld [vmem:[#allocation6 + $0x60] sm:$0xff]
    %v98 = vld [vmem:[#allocation6 + $0x68] sm:$0xff]
    %v99 = vld [vmem:[#allocation6 + $0x70] sm:$0xff]
    %v100 = vld [vmem:[#allocation6 + $0x78] sm:$0xff]
    %v101 = vld [vmem:[#allocation8] sm:$0xff]
    %v102 = vld [vmem:[#allocation8 + $0x8] sm:$0xff]
    %v103 = vld [vmem:[#allocation8 + $0x10] sm:$0xff]
    %v104 = vld [vmem:[#allocation8 + $0x18] sm:$0xff]
    %v105 = vld [vmem:[#allocation8 + $0x20] sm:$0xff]
    %v106 = vld [vmem:[#allocation8 + $0x28] sm:$0xff]
    %v107 = vld [vmem:[#allocation8 + $0x30] sm:$0xff]
    %v108 = vld [vmem:[#allocation8 + $0x38] sm:$0xff]
    %v109 = vld [vmem:[#allocation8 + $0x40] sm:$0xff]
    %v110 = vld [vmem:[#allocation8 + $0x48] sm:$0xff]
    %v111 = vld [vmem:[#allocation8 + $0x50] sm:$0xff]
    %v112 = vld [vmem:[#allocation8 + $0x58] sm:$0xff]
    %v113 = vld [vmem:[#allocation8 + $0x60] sm:$0xff]
    %v114 = vld [vmem:[#allocation8 + $0x68] sm:$0xff]
    %v115 = vld [vmem:[#allocation8 + $0x70] sm:$0xff]
    %v116 = vld [vmem:[#allocation8 + $0x78] sm:$0xff]
    %v117 = vmax.f32 %v101, 0.0
    %v118 = vmax.f32 %v102, 0.0
    %v119 = vmax.f32 %v103, 0.0
    %v120 = vmax.f32 %v104, 0.0
    %v121 = vmax.f32 %v105, 0.0
    %v122 = vmax.f32 %v106, 0.0
    %v123 = vmax.f32 %v107, 0.0
    %v124 = vmax.f32 %v108, 0.0
    %v125 = vmax.f32 %v109, 0.0
    %v126 = vmax.f32 %v110, 0.0
    %v127 = vmax.f32 %v111, 0.0
    %v128 = vmax.f32 %v112, 0.0
    %v129 = vmax.f32 %v113, 0.0
    %v130 = vmax.f32 %v114, 0.0
    %v131 = vmax.f32 %v115, 0.0
    %v132 = vmax.f32 %v116, 0.0
    %vm133 = vcmp.ne.f32.partialorder %v101, %v101
    %vm134 = vcmp.ne.f32.partialorder %v102, %v102
    %vm135 = vcmp.ne.f32.partialorder %v103, %v103
    %vm136 = vcmp.ne.f32.partialorder %v104, %v104
    %vm137 = vcmp.ne.f32.partialorder %v105, %v105
    %vm138 = vcmp.ne.f32.partialorder %v106, %v106
    %vm139 = vcmp.ne.f32.partialorder %v107, %v107
    %vm140 = vcmp.ne.f32.partialorder %v108, %v108
    %vm141 = vcmp.ne.f32.partialorder %v109, %v109
    %vm142 = vcmp.ne.f32.partialorder %v110, %v110
    %vm143 = vcmp.ne.f32.partialorder %v111, %v111
    %vm144 = vcmp.ne.f32.partialorder %v112, %v112
    %vm145 = vcmp.ne.f32.partialorder %v113, %v113
    %vm146 = vcmp.ne.f32.partialorder %v114, %v114
    %vm147 = vcmp.ne.f32.partialorder %v115, %v115
    %vm148 = vcmp.ne.f32.partialorder %v116, %v116
    %v149 = vadd.f32 %v101, 0.0
    %v150 = vadd.f32 %v102, 0.0
    %v151 = vadd.f32 %v103, 0.0
    %v152 = vadd.f32 %v104, 0.0
    %v153 = vadd.f32 %v105, 0.0
    %v154 = vadd.f32 %v106, 0.0
    %v155 = vadd.f32 %v107, 0.0
    %v156 = vadd.f32 %v108, 0.0
    %v157 = vadd.f32 %v109, 0.0
    %v158 = vadd.f32 %v110, 0.0
    %v159 = vadd.f32 %v111, 0.0
    %v160 = vadd.f32 %v112, 0.0
    %v161 = vadd.f32 %v113, 0.0
    %v162 = vadd.f32 %v114, 0.0
    %v163 = vadd.f32 %v115, 0.0
    %v164 = vadd.f32 %v116, 0.0
    %v165 = vand.u32 2147483647, %v101
    %v166 = vand.u32 2147483647, %v102
    %v167 = vand.u32 2147483647, %v103
    %v168 = vand.u32 2147483647, %v104
    %v169 = vand.u32 2147483647, %v105
    %v170 = vand.u32 2147483647, %v106
    %v171 = vand.u32 2147483647, %v107
    %v172 = vand.u32 2147483647, %v108
    %v173 = vand.u32 2147483647, %v109
    %v174 = vand.u32 2147483647, %v110
    %v175 = vand.u32 2147483647, %v111
    %v176 = vand.u32 2147483647, %v112
    %v177 = vand.u32 2147483647, %v113
    %v178 = vand.u32 2147483647, %v114
    %v179 = vand.u32 2147483647, %v115
    %v180 = vand.u32 2147483647, %v116
    %v181 = vsub.f32 0.0, %v165
    %v182 = vsub.f32 0.0, %v166
    %v183 = vsub.f32 0.0, %v167
    %v184 = vsub.f32 0.0, %v168
    %v185 = vsub.f32 0.0, %v169
    %v186 = vsub.f32 0.0, %v170
    %v187 = vsub.f32 0.0, %v171
    %v188 = vsub.f32 0.0, %v172
    %v189 = vsub.f32 0.0, %v173
    %v190 = vsub.f32 0.0, %v174
    %v191 = vsub.f32 0.0, %v175
    %v192 = vsub.f32 0.0, %v176
    %v193 = vsub.f32 0.0, %v177
    %v194 = vsub.f32 0.0, %v178
    %v195 = vsub.f32 0.0, %v179
    %v196 = vsub.f32 0.0, %v180
    %v197 = vmul.f32 %v181, 1.442695
    %v198 = vpow.pop %v197
    %v199 = vmul.f32 %v182, 1.442695
    %v200 = vpow.pop %v199
    %v201 = vmul.f32 %v183, 1.442695
    %v202 = vpow.pop %v201
    %v203 = vmul.f32 %v184, 1.442695
    %v204 = vpow.pop %v203
    %v205 = vmul.f32 %v185, 1.442695
    %v206 = vpow.pop %v205
    %v207 = vmul.f32 %v186, 1.442695
    %v208 = vpow.pop %v207
    %v209 = vmul.f32 %v187, 1.442695
    %v210 = vpow.pop %v209
    %v211 = vmul.f32 %v188, 1.442695
    %v212 = vpow.pop %v211
    %v213 = vmul.f32 %v189, 1.442695
    %v214 = vpow.pop %v213
    %v215 = vmul.f32 %v190, 1.442695
    %v216 = vpow.pop %v215
    %v217 = vmul.f32 %v191, 1.442695
    %v218 = vpow.pop %v217
    %v219 = vmul.f32 %v192, 1.442695
    %v220 = vpow.pop %v219
    %v221 = vmul.f32 %v193, 1.442695
    %v222 = vpow.pop %v221
    %v223 = vmul.f32 %v194, 1.442695
    %v224 = vpow.pop %v223
    %v225 = vmul.f32 %v195, 1.442695
    %v226 = vpow.pop %v225
    %v227 = vmul.f32 %v196, 1.442695
    %v228 = vpow.pop %v227
    %v229 = vadd.f32 %v198, 1.0
    %v230 = vlog2.pop %v229
    %v231 = vmul.f32 %v230, 0.6931472
    %v232 = vmul.f32 -0.5, %v198
    %v233 = vadd.f32 %v232, 1.0
    %v234 = vmul.f32 %v233, %v198
    %v235 = vand.u32 2147483647, %v198
    %vm236 = vcmp.lt.f32.partialorder %v235, 0.0004427343
    %v237 = vsel %vm236, %v234, %v231
    %v238 = vadd.f32 %v200, 1.0
    %v239 = vlog2.pop %v238
    %v240 = vmul.f32 %v239, 0.6931472
    %v241 = vmul.f32 -0.5, %v200
    %v242 = vadd.f32 %v241, 1.0
    %v243 = vmul.f32 %v242, %v200
    %v244 = vand.u32 2147483647, %v200
    %vm245 = vcmp.lt.f32.partialorder %v244, 0.0004427343
    %v246 = vsel %vm245, %v243, %v240
    %v247 = vadd.f32 %v202, 1.0
    %v248 = vlog2.pop %v247
    %v249 = vmul.f32 %v248, 0.6931472
    %v250 = vmul.f32 -0.5, %v202
    %v251 = vadd.f32 %v250, 1.0
    %v252 = vmul.f32 %v251, %v202
    %v253 = vand.u32 2147483647, %v202
    %vm254 = vcmp.lt.f32.partialorder %v253, 0.0004427343
    %v255 = vsel %vm254, %v252, %v249
    %v256 = vadd.f32 %v204, 1.0
    %v257 = vlog2.pop %v256
    %v258 = vmul.f32 %v257, 0.6931472
    %v259 = vmul.f32 -0.5, %v204
    %v260 = vadd.f32 %v259, 1.0
    %v261 = vmul.f32 %v260, %v204
    %v262 = vand.u32 2147483647, %v204
    %vm263 = vcmp.lt.f32.partialorder %v262, 0.0004427343
    %v264 = vsel %vm263, %v261, %v258
    %v265 = vadd.f32 %v206, 1.0
    %v266 = vlog2.pop %v265
    %v267 = vmul.f32 %v266, 0.6931472
    %v268 = vmul.f32 -0.5, %v206
    %v269 = vadd.f32 %v268, 1.0
    %v270 = vmul.f32 %v269, %v206
    %v271 = vand.u32 2147483647, %v206
    %vm272 = vcmp.lt.f32.partialorder %v271, 0.0004427343
    %v273 = vsel %vm272, %v270, %v267
    %v274 = vadd.f32 %v208, 1.0
    %v275 = vlog2.pop %v274
    %v276 = vmul.f32 %v275, 0.6931472
    %v277 = vmul.f32 -0.5, %v208
    %v278 = vadd.f32 %v277, 1.0
    %v279 = vmul.f32 %v278, %v208
    %v280 = vand.u32 2147483647, %v208
    %vm281 = vcmp.lt.f32.partialorder %v280, 0.0004427343
    %v282 = vsel %vm281, %v279, %v276
    %v283 = vadd.f32 %v210, 1.0
    %v284 = vlog2.pop %v283
    %v285 = vmul.f32 %v284, 0.6931472
    %v286 = vmul.f32 -0.5, %v210
    %v287 = vadd.f32 %v286, 1.0
    %v288 = vmul.f32 %v287, %v210
    %v289 = vand.u32 2147483647, %v210
    %vm290 = vcmp.lt.f32.partialorder %v289, 0.0004427343
    %v291 = vsel %vm290, %v288, %v285
    %v292 = vadd.f32 %v212, 1.0
    %v293 = vlog2.pop %v292
    %v294 = vmul.f32 %v293, 0.6931472
    %v295 = vmul.f32 -0.5, %v212
    %v296 = vadd.f32 %v295, 1.0
    %v297 = vmul.f32 %v296, %v212
    %v298 = vand.u32 2147483647, %v212
    %vm299 = vcmp.lt.f32.partialorder %v298, 0.0004427343
    %v300 = vsel %vm299, %v297, %v294
    %v301 = vadd.f32 %v214, 1.0
    %v302 = vlog2.pop %v301
    %v303 = vmul.f32 %v302, 0.6931472
    %v304 = vmul.f32 -0.5, %v214
    %v305 = vadd.f32 %v304, 1.0
    %v306 = vmul.f32 %v305, %v214
    %v307 = vand.u32 2147483647, %v214
    %vm308 = vcmp.lt.f32.partialorder %v307, 0.0004427343
    %v309 = vsel %vm308, %v306, %v303
    %v310 = vadd.f32 %v216, 1.0
    %v311 = vlog2.pop %v310
    %v312 = vmul.f32 %v311, 0.6931472
    %v313 = vmul.f32 -0.5, %v216
    %v314 = vadd.f32 %v313, 1.0
    %v315 = vmul.f32 %v314, %v216
    %v316 = vand.u32 2147483647, %v216
    %vm317 = vcmp.lt.f32.partialorder %v316, 0.0004427343
    %v318 = vsel %vm317, %v315, %v312
    %v319 = vadd.f32 %v218, 1.0
    %v320 = vlog2.pop %v319
    %v321 = vmul.f32 %v320, 0.6931472
    %v322 = vmul.f32 -0.5, %v218
    %v323 = vadd.f32 %v322, 1.0
    %v324 = vmul.f32 %v323, %v218
    %v325 = vand.u32 2147483647, %v218
    %vm326 = vcmp.lt.f32.partialorder %v325, 0.0004427343
    %v327 = vsel %vm326, %v324, %v321
    %v328 = vadd.f32 %v220, 1.0
    %v329 = vlog2.pop %v328
    %v330 = vmul.f32 %v329, 0.6931472
    %v331 = vmul.f32 -0.5, %v220
    %v332 = vadd.f32 %v331, 1.0
    %v333 = vmul.f32 %v332, %v220
    %v334 = vand.u32 2147483647, %v220
    %vm335 = vcmp.lt.f32.partialorder %v334, 0.0004427343
    %v336 = vsel %vm335, %v333, %v330
    %v337 = vadd.f32 %v222, 1.0
    %v338 = vlog2.pop %v337
    %v339 = vmul.f32 %v338, 0.6931472
    %v340 = vmul.f32 -0.5, %v222
    %v341 = vadd.f32 %v340, 1.0
    %v342 = vmul.f32 %v341, %v222
    %v343 = vand.u32 2147483647, %v222
    %vm344 = vcmp.lt.f32.partialorder %v343, 0.0004427343
    %v345 = vsel %vm344, %v342, %v339
    %v346 = vadd.f32 %v224, 1.0
    %v347 = vlog2.pop %v346
    %v348 = vmul.f32 %v347, 0.6931472
    %v349 = vmul.f32 -0.5, %v224
    %v350 = vadd.f32 %v349, 1.0
    %v351 = vmul.f32 %v350, %v224
    %v352 = vand.u32 2147483647, %v224
    %vm353 = vcmp.lt.f32.partialorder %v352, 0.0004427343
    %v354 = vsel %vm353, %v351, %v348
    %v355 = vadd.f32 %v226, 1.0
    %v356 = vlog2.pop %v355
    %v357 = vmul.f32 %v356, 0.6931472
    %v358 = vmul.f32 -0.5, %v226
    %v359 = vadd.f32 %v358, 1.0
    %v360 = vmul.f32 %v359, %v226
    %v361 = vand.u32 2147483647, %v226
    %vm362 = vcmp.lt.f32.partialorder %v361, 0.0004427343
    %v363 = vsel %vm362, %v360, %v357
    %v364 = vadd.f32 %v228, 1.0
    %v365 = vlog2.pop %v364
    %v366 = vmul.f32 %v365, 0.6931472
    %v367 = vmul.f32 -0.5, %v228
    %v368 = vadd.f32 %v367, 1.0
    %v369 = vmul.f32 %v368, %v228
    %v370 = vand.u32 2147483647, %v228
    %vm371 = vcmp.lt.f32.partialorder %v370, 0.0004427343
    %v372 = vsel %vm371, %v369, %v366
    %v373 = vadd.f32 %v117, %v237
    %v374 = vadd.f32 %v118, %v246
    %v375 = vadd.f32 %v119, %v255
    %v376 = vadd.f32 %v120, %v264
    %v377 = vadd.f32 %v121, %v273
    %v378 = vadd.f32 %v122, %v282
    %v379 = vadd.f32 %v123, %v291
    %v380 = vadd.f32 %v124, %v300
    %v381 = vadd.f32 %v125, %v309
    %v382 = vadd.f32 %v126, %v318
    %v383 = vadd.f32 %v127, %v327
    %v384 = vadd.f32 %v128, %v336
    %v385 = vadd.f32 %v129, %v345
    %v386 = vadd.f32 %v130, %v354
    %v387 = vadd.f32 %v131, %v363
    %v388 = vadd.f32 %v132, %v372
    %v389 = vsel %vm133, %v149, %v373
    %v390 = vsel %vm134, %v150, %v374
    %v391 = vsel %vm135, %v151, %v375
    %v392 = vsel %vm136, %v152, %v376
    %v393 = vsel %vm137, %v153, %v377
    %v394 = vsel %vm138, %v154, %v378
    %v395 = vsel %vm139, %v155, %v379
    %v396 = vsel %vm140, %v156, %v380
    %v397 = vsel %vm141, %v157, %v381
    %v398 = vsel %vm142, %v158, %v382
    %v399 = vsel %vm143, %v159, %v383
    %v400 = vsel %vm144, %v160, %v384
    %v401 = vsel %vm145, %v161, %v385
    %v402 = vsel %vm146, %v162, %v386
    %v403 = vsel %vm147, %v163, %v387
    %v404 = vsel %vm148, %v164, %v388
    %v405 = vld [vmem:[#allocation9] sm:$0xff]
    %v406 = vld [vmem:[#allocation9 + $0x8] sm:$0xff]
    %v407 = vld [vmem:[#allocation9 + $0x10] sm:$0xff]
    %v408 = vld [vmem:[#allocation9 + $0x18] sm:$0xff]
    %v409 = vld [vmem:[#allocation9 + $0x20] sm:$0xff]
    %v410 = vld [vmem:[#allocation9 + $0x28] sm:$0xff]
    %v411 = vld [vmem:[#allocation9 + $0x30] sm:$0xff]
    %v412 = vld [vmem:[#allocation9 + $0x38] sm:$0xff]
    %v413 = vld [vmem:[#allocation9 + $0x40] sm:$0xff]
    %v414 = vld [vmem:[#allocation9 + $0x48] sm:$0xff]
    %v415 = vld [vmem:[#allocation9 + $0x50] sm:$0xff]
    %v416 = vld [vmem:[#allocation9 + $0x58] sm:$0xff]
    %v417 = vld [vmem:[#allocation9 + $0x60] sm:$0xff]
    %v418 = vld [vmem:[#allocation9 + $0x68] sm:$0xff]
    %v419 = vld [vmem:[#allocation9 + $0x70] sm:$0xff]
    %v420 = vld [vmem:[#allocation9 + $0x78] sm:$0xff]
    %v421 = vmul.f32 %v389, %v405
    %v422 = vmul.f32 %v390, %v406
    %v423 = vmul.f32 %v391, %v407
    %v424 = vmul.f32 %v392, %v408
    %v425 = vmul.f32 %v393, %v409
    %v426 = vmul.f32 %v394, %v410
    %v427 = vmul.f32 %v395, %v411
    %v428 = vmul.f32 %v396, %v412
    %v429 = vmul.f32 %v397, %v413
    %v430 = vmul.f32 %v398, %v414
    %v431 = vmul.f32 %v399, %v415
    %v432 = vmul.f32 %v400, %v416
    %v433 = vmul.f32 %v401, %v417
    %v434 = vmul.f32 %v402, %v418
    %v435 = vmul.f32 %v403, %v419
    %v436 = vmul.f32 %v404, %v420
    %v437 = vadd.f32 %v85, %v421
    %v438 = vadd.f32 %v86, %v422
    %v439 = vadd.f32 %v87, %v423
    %v440 = vadd.f32 %v88, %v424
    %v441 = vadd.f32 %v89, %v425
    %v442 = vadd.f32 %v90, %v426
    %v443 = vadd.f32 %v91, %v427
    %v444 = vadd.f32 %v92, %v428
    %v445 = vadd.f32 %v93, %v429
    %v446 = vadd.f32 %v94, %v430
    %v447 = vadd.f32 %v95, %v431
    %v448 = vadd.f32 %v96, %v432
    %v449 = vadd.f32 %v97, %v433
    %v450 = vadd.f32 %v98, %v434
    %v451 = vadd.f32 %v99, %v435
    %v452 = vadd.f32 %v100, %v436
    %v453 = vld [vmem:[#allocation2] sm:$0xff]
    %v454 = vld [vmem:[#allocation3] sm:$0xff]
    %455 = vmatprep.subr.mxu0 0.0
    %456 = vmatpush1.xpose.msra.mxu0 %v452
    %457 = vmatprep.subr.mxu0 0.0
    %458 = vmatpush1.xpose.msra.mxu0 %v451
    %459 = vmatprep.subr.mxu0 0.0
    %460 = vmatpush1.xpose.msra.mxu0 %v450
    %461 = vmatprep.subr.mxu0 0.0
    %462 = vmatpush1.xpose.msra.mxu0 %v449
    %463 = vmatprep.subr.mxu0 0.0
    %464 = vmatpush1.xpose.msra.mxu0 %v448
    %465 = vmatprep.subr.mxu0 0.0
    %466 = vmatpush1.xpose.msra.mxu0 %v447
    %467 = vmatprep.subr.mxu0 0.0
    %468 = vmatpush1.xpose.msra.mxu0 %v446
    %469 = vmatprep.subr.mxu0 0.0
    %470 = vmatpush1.xpose.msra.mxu0 %v445
    %471 = vmatprep.subr.mxu0 0.0
    %472 = vmatpush1.xpose.msra.mxu0 %v444
    %473 = vmatprep.subr.mxu0 0.0
    %474 = vmatpush1.xpose.msra.mxu0 %v443
    %475 = vmatprep.subr.mxu0 0.0
    %476 = vmatpush1.xpose.msra.mxu0 %v442
    %477 = vmatprep.subr.mxu0 0.0
    %478 = vmatpush1.xpose.msra.mxu0 %v441
    %479 = vmatprep.subr.mxu0 0.0
    %480 = vmatpush1.xpose.msra.mxu0 %v440
    %481 = vmatprep.subr.mxu0 0.0
    %482 = vmatpush1.xpose.msra.mxu0 %v439
    %483 = vmatprep.subr.mxu0 0.0
    %484 = vmatpush1.xpose.msra.mxu0 %v438
    %485 = vmatprep.subr.mxu0 0.0
    %486 = vmatpush1.xpose.msra.mxu0 %v437
    %487 = vmatprep.subr.mxu0 0.0
    %488 = vmatpush2.xpose.msra.mxu0 0.0
    %489 = vmatprep.subr.mxu0 0.0
    %490 = vmatpush2.xpose.msra.mxu0 0.0
    %491 = vmatprep.subr.mxu0 0.0
    %492 = vmatpush2.xpose.msra.mxu0 0.0
    %493 = vmatprep.subr.mxu0 0.0
    %494 = vmatpush2.xpose.msra.mxu0 0.0
    %495 = vmatprep.subr.mxu0 0.0
    %496 = vmatpush2.xpose.msra.mxu0 0.0
    %497 = vmatprep.subr.mxu0 0.0
    %498 = vmatpush2.xpose.msra.mxu0 0.0
    %499 = vmatprep.subr.mxu0 0.0
    %500 = vmatpush2.xpose.msra.mxu0 0.0
    %501 = vmatprep.subr.mxu0 0.0
    %502 = vmatpush2.xpose.msra.mxu0 0.0
    %503 = vmatprep.subr.mxu0 0.0
    %504 = vmatpush2.xpose.msra.mxu0 0.0
    %505 = vmatprep.subr.mxu0 0.0
    %506 = vmatpush2.xpose.msra.mxu0 0.0
    %507 = vmatprep.subr.mxu0 0.0
    %508 = vmatpush2.xpose.msra.mxu0 0.0
    %509 = vmatprep.subr.mxu0 0.0
    %510 = vmatpush2.xpose.msra.mxu0 0.0
    %511 = vmatprep.subr.mxu0 0.0
    %512 = vmatpush2.xpose.msra.mxu0 0.0
    %513 = vmatprep.subr.mxu0 0.0
    %514 = vmatpush2.xpose.msra.mxu0 0.0
    %515 = vmatprep.subr.mxu0 0.0
    %516 = vmatpush2.xpose.msra.mxu0 0.0
    %517 = vmatprep.subr.mxu0 0.0
    %518 = vmatpush2.xpose.msra.mxu0 0.0
    %519 = vmatprep.mubr.f32.mxu0 0.0
    %520 = vmatmul.mubr.f32.gmra.mxu0 %v454
    %v521 = vpop.f32.mrf.mxu0
    %v522 = vadd.f32 0.0, %v521
    %v523 = vpop.f32.mrf.mxu0
    %524 = vdwg.mxu0
    %v525 = vadd.f32 %v453, %v522
    %526 = vst [vmem:[#allocation2] sm:$0xff] %v525
    // Predicated region
    $region50: #{tpu_custom_call.1} parent=1 // pred_check
      %p527 = pneg %p80
    $region51: #{tpu_custom_call.1} parent=1 // pred_check_branch
      %529 = sbr.rel (%p527) target = $region53
    $region52: #{tpu_custom_call.1} parent=1 // pred_region
      %v530 = vld [vmem:[%s4] sm:$0x1]
      %v531 = vld [vmem:[%s5] sm:$0x1]
      %v532 = vmax.f32 %v531, 0.0
      %vm533 = vcmp.ne.f32.partialorder %v531, %v531
      %v534 = vadd.f32 %v531, 0.0
      %v535 = vand.u32 2147483647, %v531
      %v536 = vsub.f32 0.0, %v535
      %v537 = vmul.f32 %v536, 1.442695
      %v538 = vpow.pop %v537
      %v539 = vadd.f32 %v538, 1.0
      %v540 = vlog2.pop %v539
      %v541 = vmul.f32 %v540, 0.6931472
      %v542 = vmul.f32 -0.5, %v538
      %v543 = vadd.f32 %v542, 1.0
      %v544 = vmul.f32 %v543, %v538
      %v545 = vand.u32 2147483647, %v538
      %vm546 = vcmp.lt.f32.partialorder %v545, 0.0004427343
      %v547 = vsel %vm546, %v544, %v541
      %v548 = vadd.f32 %v532, %v547
      %v549 = vsel %vm533, %v534, %v548
      %v550 = vld [vmem:[%s6] sm:$0x1]
      %v551 = vmul.f32 %v549, %v550
      %v552 = vadd.f32 %v530, %v551
      %v553 = vld [vmem:[#allocation2] sm:$0xff]
      %v555 = vlaneseq
      %v556 = vshrl.u32 %v555, 7
      %v557 = vsub.s32 0, %v556
      %v558 = vrot.slane %v552, %v557
      %v560 = vadd.f32 %v553, %v558
      %561 = vst [vmem:[#allocation11] sm:$0xff] %v560
    $region53: #{tpu_custom_call.1} parent=1 // pred_fallthru
      _
    // Predicated region
    $region54: #{tpu_custom_call.1} parent=1 // pred_check
      _
    $region55: #{tpu_custom_call.1} parent=1 // pred_check_branch
      %563 = sbr.rel (0) target = $region57
    $region56: #{tpu_custom_call.1} parent=1 // pred_region
      %s565 = ssub.s32 128, 128
      %566 = vsyncadd [#allocation5], %s565
      %s568 = sshll.u32 [#allocation11], 4
      %s569 = int_to_ptr.vmem [resolvable:$true] %s568
      %571 = dma.vmem_to_hbm [thread:$0]  %s569, 128, %s7, [#allocation5]
    $region57: #{tpu_custom_call.1} parent=1 // pred_fallthru
      _
    // Predicated region
    $region58: #{tpu_custom_call.1} parent=1 // pred_check
      _
    $region59: #{tpu_custom_call.1} parent=1 // pred_check_branch
      %573 = sbr.rel (0) target = $region61
    $region60: #{tpu_custom_call.1} parent=1 // pred_region
      %574 = dma.done [#allocation5], 128
    $region61: #{tpu_custom_call.1} parent=1 // pred_fallthru
      _
    %575 = vsyncpa [#allocation4], 1
    %576 = vsyncpa [#allocation7], 1
    %577 = vsyncpa [#allocation10], 1
    %578 = vsyncpa [#allocation5], 1

</llo_original>
